<compile_context>
chip_gen: v5e
topology: v5e:2x2
jax: 0.10.0
libtpu: 0.0.40
codegen_flags: <defaults>
</compile_context>

<pallas_src>
import functools

import jax
import jax.numpy as jnp
from jax import lax
from jax.experimental import pallas as pl
from jax.experimental.pallas import tpu as pltpu

_LANES = 128


def _ce_acc_kernel(logits_ref, truth_ref, pred_ref, nll_ref, cor_ref, *,
                   total_rows, tile_rows, ragged):
    """Fused CE partial-sum + accuracy partial-sum + argmax for one row tile.

    logits_ref: (TB, C) native-dtype VMEM (cast to f32 here)
    truth_ref : (TB, 1) int32 VMEM
    pred_ref  : (TB, 1) int32 VMEM        -- argmax (first index on ties)
    nll_ref   : (1, 1, 128) f32 VMEM      -- tile sum of -log p[truth], splat
    cor_ref   : (1, 1, 128) f32 VMEM      -- tile count of correct rows, splat
    """
    logits = logits_ref[...].astype(jnp.float32)           # (TB, C) f32 compute
    truth = truth_ref[...].astype(jnp.int32)               # (TB, 1)
    tb, c = logits.shape

    class_ids = lax.broadcasted_iota(jnp.int32, (tb, c), 1)

    # Stable cross-entropy without materializing log-softmax:
    #   nll = row_max + log(sum(exp(x - row_max))) - x[truth]
    row_max = jnp.max(logits, axis=-1, keepdims=True)                     # (TB,1)
    sum_exp = jnp.sum(jnp.exp(logits - row_max), axis=-1, keepdims=True)  # (TB,1)
    one_hot = (class_ids == truth).astype(jnp.float32)                    # (TB,C)
    true_logit = jnp.sum(one_hot * logits, axis=-1, keepdims=True)        # (TB,1)
    per_row_nll = row_max + jnp.log(sum_exp) - true_logit                 # (TB,1)

    # argmax with first-index tie-breaking (torch.argmax semantics); both the
    # max and the comparison are f32 so ties resolve identically.
    is_max = logits == row_max
    arg = jnp.min(jnp.where(is_max, class_ids, jnp.int32(c)),
                  axis=-1, keepdims=True)                                 # (TB,1)
    correct = (arg == truth).astype(jnp.float32)                          # (TB,1)

    if ragged:
        # Last tile may hang past the true batch; exclude padded (garbage)
        # rows from the partial sums.  Row-wise math never crosses rows, so
        # garbage cannot pollute valid rows.
        base = pl.program_id(0) * tile_rows
        row_ids = base + lax.broadcasted_iota(jnp.int32, (tb, 1), 0)
        valid = row_ids < total_rows
        per_row_nll = jnp.where(valid, per_row_nll, 0.0)
        correct = jnp.where(valid, correct, 0.0)

    pred_ref[...] = arg
    # Lane-dense partial sums (scalar splat across 128 lanes -> unmasked vst).
    nll_ref[...] = jnp.broadcast_to(jnp.sum(per_row_nll),
                                    (1, 1, _LANES)).astype(jnp.float32)
    cor_ref[...] = jnp.broadcast_to(jnp.sum(correct),
                                    (1, 1, _LANES)).astype(jnp.float32)


def _choose_tile_rows(batch, num_classes, itemsize):
    """Largest row tile whose double-buffered logits block stays VMEM-safe."""
    budget_bytes = 8 * 1024 * 1024           # per logits block (x2 double-buf)
    rows = budget_bytes // max(1, num_classes * itemsize)
    rows = min(rows, 1024)
    if batch <= max(rows, 8):
        return batch                          # single tile == full array dims
    return max(128, (rows // 128) * 128)      # lane/sublane aligned, any dtype


def base_predictor_loss_accuracy(prediction, truth, *, tile_rows=None):
    """prediction: (B, C) logits (any float dtype); truth: (B,) or (B, 1) ints.

    Returns (loss, accuracy, argmax_predictions), mirroring
    BasePredictor.loss / .accuracy / .predict.
    """
    if prediction.ndim == 1:                  # mirrors torch `unsqueeze(0)`
        prediction = prediction[None, :]
    b, c = prediction.shape
    truth = truth.reshape(b, 1).astype(jnp.int32)

    if tile_rows is None:
        tile_rows = _choose_tile_rows(b, c, prediction.dtype.itemsize)
    num_tiles = pl.cdiv(b, tile_rows)
    ragged = (b % tile_rows) != 0

    kernel = functools.partial(_ce_acc_kernel, total_rows=b,
                               tile_rows=tile_rows, ragged=ragged)

    pred, nll_part, cor_part = pl.pallas_call(
        kernel,
        grid=(num_tiles,),
        out_shape=(
            jax.ShapeDtypeStruct((b, 1), jnp.int32),
            jax.ShapeDtypeStruct((num_tiles, 1, _LANES), jnp.float32),
            jax.ShapeDtypeStruct((num_tiles, 1, _LANES), jnp.float32),
        ),
        in_specs=[
            pl.BlockSpec((tile_rows, c), lambda i: (i, 0)),
            pl.BlockSpec((tile_rows, 1), lambda i: (i, 0)),
        ],
        out_specs=(
            pl.BlockSpec((tile_rows, 1), lambda i: (i, 0)),
            pl.BlockSpec((1, 1, _LANES), lambda i: (i, 0, 0)),
            pl.BlockSpec((1, 1, _LANES), lambda i: (i, 0, 0)),
        ),
        compiler_params=pltpu.CompilerParams(
            dimension_semantics=("parallel",),
            vmem_limit_bytes=32 * 1024 * 1024,
        ),
    )(prediction, truth)

    inv_b = 1.0 / float(b)
    loss = jnp.sum(nll_part[:, 0, 0]) * inv_b
    acc = jnp.sum(cor_part[:, 0, 0]) * inv_b
    return loss, acc, pred[:, 0]


def _reference(prediction, truth):
    """Pure-JAX reference matching nn.CrossEntropyLoss / accuracy / argmax."""
    truth = truth.reshape(-1).astype(jnp.int32)
    logits = prediction.astype(jnp.float32)
    logp = jax.nn.log_softmax(logits, axis=-1)
    loss = -jnp.mean(logp[jnp.arange(logits.shape[0]), truth])
    pred = jnp.argmax(logits, axis=-1).astype(jnp.int32)
    acc = jnp.mean((pred == truth).astype(jnp.float32))
    return loss, acc, pred


if __name__ == "__main__":
    key = jax.random.PRNGKey(0)
    k1, k2, k3, k4 = jax.random.split(key, 4)

    # Case 1: tiny batch, bf16 logits fed natively (no wrapper up-cast).
    B1, C1 = 8, 16
    logits1 = jax.random.normal(k1, (B1, C1), dtype=jnp.float32).astype(jnp.bfloat16)
    truth1 = jax.random.randint(k2, (B1, 1), 0, C1, dtype=jnp.int32)
    loss1, acc1, pred1 = base_predictor_loss_accuracy(logits1, truth1)
    jax.block_until_ready((loss1, acc1, pred1))
    rl1, ra1, rp1 = _reference(logits1, truth1)
    assert jnp.allclose(loss1, rl1, atol=1e-5, rtol=1e-5), (loss1, rl1)
    assert jnp.allclose(acc1, ra1), (acc1, ra1)
    assert jnp.array_equal(pred1, rp1), (pred1, rp1)

    # Case 2: multi-tile "parallel" grid with a ragged last tile (exercises
    # the masking path and per-tile partial sums), f32 logits.
    B2, C2 = 300, 16
    logits2 = jax.random.normal(k3, (B2, C2), dtype=jnp.float32)
    truth2 = jax.random.randint(k4, (B2, 1), 0, C2, dtype=jnp.int32)
    loss2, acc2, pred2 = base_predictor_loss_accuracy(logits2, truth2,
                                                      tile_rows=128)
    jax.block_until_ready((loss2, acc2, pred2))
    rl2, ra2, rp2 = _reference(logits2, truth2)
    assert jnp.allclose(loss2, rl2, atol=1e-5, rtol=1e-5), (loss2, rl2)
    assert jnp.allclose(acc2, ra2), (acc2, ra2)
    assert jnp.array_equal(pred2, rp2), (pred2, rp2)

    print("KERNEL_OK")
</pallas_src>

<mosaic_0001>
module attributes {stable_mosaic.version = 11 : i64} {
  func.func @_ce_acc_kernel(%arg0: i32, %arg1: memref<8x16xbf16, #tpu.memory_space<vmem>>, %arg2: memref<8x1xi32, #tpu.memory_space<vmem>>, %arg3: memref<8x1xi32, #tpu.memory_space<vmem>>, %arg4: memref<1x1x128xf32, #tpu.memory_space<vmem>>, %arg5: memref<1x1x128xf32, #tpu.memory_space<vmem>>) attributes {dimension_semantics = [#tpu.dimension_semantics<parallel>], iteration_bounds = array<i64: 1>, scalar_prefetch = 0 : i64, scratch_operands = 0 : i64, tpu.core_type = #tpu.core_type<tc>, window_params = [{transform_indices = @transform_0, window_bounds = array<i64: 8, 16>}, {transform_indices = @transform_1, window_bounds = array<i64: 8, 1>}, {transform_indices = @transform_2, window_bounds = array<i64: 8, 1>}, {transform_indices = @transform_3, window_bounds = array<i64: 1, 1, 128>}, {transform_indices = @transform_4, window_bounds = array<i64: 1, 1, 128>}]} {
    %c0 = arith.constant 0 : index
    %c0_0 = arith.constant 0 : index
    %0 = vector.load %arg1[%c0, %c0_0] : memref<8x16xbf16, #tpu.memory_space<vmem>>, vector<8x16xbf16>
    %1 = arith.extf %0 : vector<8x16xbf16> to vector<8x16xf32>
    %c0_1 = arith.constant 0 : index
    %c0_2 = arith.constant 0 : index
    %2 = vector.load %arg2[%c0_1, %c0_2] : memref<8x1xi32, #tpu.memory_space<vmem>>, vector<8x1xi32>
    %3 = tpu.iota {dimensions = array<i32: 1>} : vector<8x16xi32>
    %cst = arith.constant dense<0xFF800000> : vector<8xf32>
    %4 = vector.multi_reduction <maximumf>, %1, %cst [1] : vector<8x16xf32> to vector<8xf32>
    %5 = vector.shape_cast %4 : vector<8xf32> to vector<8x1xf32>
    %6 = vector.broadcast %5 : vector<8x1xf32> to vector<8x16xf32>
    %7 = arith.subf %1, %6 : vector<8x16xf32>
    %8 = math.exp %7 : vector<8x16xf32>
    %cst_3 = arith.constant dense<0.000000e+00> : vector<8xf32>
    %9 = vector.multi_reduction <add>, %8, %cst_3 [1] : vector<8x16xf32> to vector<8xf32>
    %10 = vector.shape_cast %9 : vector<8xf32> to vector<8x1xf32>
    %11 = vector.broadcast %2 : vector<8x1xi32> to vector<8x16xi32>
    %12 = arith.cmpi eq, %3, %11 : vector<8x16xi32>
    %13 = arith.extui %12 : vector<8x16xi1> to vector<8x16xi32>
    %14 = arith.sitofp %13 : vector<8x16xi32> to vector<8x16xf32>
    %15 = arith.mulf %14, %1 : vector<8x16xf32>
    %cst_4 = arith.constant dense<0.000000e+00> : vector<8xf32>
    %16 = vector.multi_reduction <add>, %15, %cst_4 [1] : vector<8x16xf32> to vector<8xf32>
    %17 = vector.shape_cast %16 : vector<8xf32> to vector<8x1xf32>
    %18 = math.log %10 : vector<8x1xf32>
    %19 = arith.addf %5, %18 : vector<8x1xf32>
    %20 = arith.subf %19, %17 : vector<8x1xf32>
    %21 = vector.broadcast %5 : vector<8x1xf32> to vector<8x16xf32>
    %22 = arith.cmpf oeq, %1, %21 : vector<8x16xf32>
    %c16_i32 = arith.constant 16 : i32
    %23 = vector.broadcast %c16_i32 : i32 to vector<8x16xi32>
    %24 = arith.select %22, %3, %23 : vector<8x16xi1>, vector<8x16xi32>
    %cst_5 = arith.constant dense<2147483647> : vector<8xi32>
    %25 = vector.multi_reduction <minsi>, %24, %cst_5 [1] : vector<8x16xi32> to vector<8xi32>
    %26 = vector.shape_cast %25 : vector<8xi32> to vector<8x1xi32>
    %27 = arith.cmpi eq, %26, %2 : vector<8x1xi32>
    %28 = arith.extui %27 : vector<8x1xi1> to vector<8x1xi32>
    %29 = arith.sitofp %28 : vector<8x1xi32> to vector<8x1xf32>
    %c0_6 = arith.constant 0 : index
    %c0_7 = arith.constant 0 : index
    %30 = vector.load %arg3[%c0_6, %c0_7] : memref<8x1xi32, #tpu.memory_space<vmem>>, vector<8x1xi32>
    tpu.vector_store %arg3[%c0_6, %c0_7], %26 {strides = array<i32>} : memref<8x1xi32, #tpu.memory_space<vmem>>, vector<8x1xi32>,
    %31 = vector.shape_cast %20 : vector<8x1xf32> to vector<1x8x1xf32>
    %cst_8 = arith.constant dense<0.000000e+00> : vector<1xf32>
    %32 = vector.multi_reduction <add>, %31, %cst_8 [1, 2] : vector<1x8x1xf32> to vector<1xf32>
    %33 = vector.shape_cast %32 : vector<1xf32> to vector<1x1x1xf32>
    %34 = vector.extract %33[0, 0, 0] : f32 from vector<1x1x1xf32>
    %35 = vector.broadcast %34 : f32 to vector<1x1x128xf32>
    %c0_9 = arith.constant 0 : index
    %c0_10 = arith.constant 0 : index
    %c0_11 = arith.constant 0 : index
    %36 = vector.load %arg4[%c0_9, %c0_10, %c0_11] : memref<1x1x128xf32, #tpu.memory_space<vmem>>, vector<1x1x128xf32>
    tpu.vector_store %arg4[%c0_9, %c0_10, %c0_11], %35 {strides = array<i32>} : memref<1x1x128xf32, #tpu.memory_space<vmem>>, vector<1x1x128xf32>,
    %37 = vector.shape_cast %29 : vector<8x1xf32> to vector<1x8x1xf32>
    %cst_12 = arith.constant dense<0.000000e+00> : vector<1xf32>
    %38 = vector.multi_reduction <add>, %37, %cst_12 [1, 2] : vector<1x8x1xf32> to vector<1xf32>
    %39 = vector.shape_cast %38 : vector<1xf32> to vector<1x1x1xf32>
    %40 = vector.extract %39[0, 0, 0] : f32 from vector<1x1x1xf32>
    %41 = vector.broadcast %40 : f32 to vector<1x1x128xf32>
    %c0_13 = arith.constant 0 : index
    %c0_14 = arith.constant 0 : index
    %c0_15 = arith.constant 0 : index
    %42 = vector.load %arg5[%c0_13, %c0_14, %c0_15] : memref<1x1x128xf32, #tpu.memory_space<vmem>>, vector<1x1x128xf32>
    tpu.vector_store %arg5[%c0_13, %c0_14, %c0_15], %41 {strides = array<i32>} : memref<1x1x128xf32, #tpu.memory_space<vmem>>, vector<1x1x128xf32>,
    return
  }
  func.func @transform_0(%arg0: i32) -> (i32, i32) {
    %c0_i32 = arith.constant 0 : i32
    %c0_i32_0 = arith.constant 0 : i32
    return %arg0, %c0_i32 : i32, i32
  }
  func.func @transform_1(%arg0: i32) -> (i32, i32) {
    %c0_i32 = arith.constant 0 : i32
    %c0_i32_0 = arith.constant 0 : i32
    return %arg0, %c0_i32 : i32, i32
  }
  func.func @transform_2(%arg0: i32) -> (i32, i32) {
    %c0_i32 = arith.constant 0 : i32
    %c0_i32_0 = arith.constant 0 : i32
    return %arg0, %c0_i32 : i32, i32
  }
  func.func @transform_3(%arg0: i32) -> (i32, i32, i32) {
    %c0_i32 = arith.constant 0 : i32
    %c0_i32_0 = arith.constant 0 : i32
    %c0_i32_1 = arith.constant 0 : i32
    return %arg0, %c0_i32, %c0_i32_0 : i32, i32, i32
  }
  func.func @transform_4(%arg0: i32) -> (i32, i32, i32) {
    %c0_i32 = arith.constant 0 : i32
    %c0_i32_0 = arith.constant 0 : i32
    %c0_i32_1 = arith.constant 0 : i32
    return %arg0, %c0_i32, %c0_i32_0 : i32, i32, i32
  }
}

</mosaic_0001>

<llo_original>
// kernel: tpu_custom_call.1
$region0: #{tpu_custom_call.1}
  #allocation0 [shape = 'u32[]', space=smem, size = 0x4, offset = 0x4, fixed_abs, tag = 'smem constant byte address 0x4 - core index']
  #allocation1 [shape = 'u32[72,128]{1,0:T(1,128)}', space=vmem, size = 0x9000, scoped, tag = 'internal scratch']
  %s0 = inlined_call_operand.vmem [shape: bf16[8,16], index: 0, kind: input, shape index: {}]
  %s1 = inlined_call_operand.vmem [shape: s32[8,1], index: 1, kind: input, shape index: {}]
  %s2 = inlined_call_operand.vmem [shape: s32[8,1], index: 2, kind: output, shape index: {0}]
  %s3 = inlined_call_operand.hbm [shape: f32[1,1,128], index: 3, kind: output, shape index: {1}]
  %s4 = inlined_call_operand.hbm [shape: f32[1,1,128], index: 4, kind: output, shape index: {2}]
  %5 = xla_tuple %s2, %s3, %s4
  %s6 = sld [smem:[#allocation0]]
  $region34: #{tpu_custom_call.1} parent=0
    _
  %s8 = ssub.s32 1, %s6
  %s9 = scalar_select 0, %s8, %s6
  $region1: #{tpu_custom_call.1} parent=0
    #allocation2 [shape = 'u8[512]{0}', space=vmem, size = 0x400, scoped, tag = 'output window, operand 1, single buffered']
    #allocation3 [shape = 's32[1]{0}', space=sflag, size = 0x4, scoped, tag = 'scoped memory for tpu_custom_call.1']
    #allocation4 [shape = 'u8[512]{0}', space=vmem, size = 0x400, scoped, tag = 'output window, operand 2, single buffered']
    #allocation5 [shape = 's32[1]{0}', space=sflag, size = 0x4, scoped, tag = 'scoped memory for tpu_custom_call.1']
    %10 = vsyncpa [#allocation3], 0
    %11 = vsyncpa [#allocation5], 0
    // Predicated region
    $region2: #{tpu_custom_call.1} parent=1 // pred_check
      _
    $region3: #{tpu_custom_call.1} parent=1 // pred_check_branch
      %13 = sbr.rel (0) target = $region5
    $region4: #{tpu_custom_call.1} parent=1 // pred_region
      _
    $region5: #{tpu_custom_call.1} parent=1 // pred_fallthru
      _
    // Predicated region
    $region6: #{tpu_custom_call.1} parent=1 // pred_check
      _
    $region7: #{tpu_custom_call.1} parent=1 // pred_check_branch
      %15 = sbr.rel (0) target = $region9
    $region8: #{tpu_custom_call.1} parent=1 // pred_region
      _
    $region9: #{tpu_custom_call.1} parent=1 // pred_fallthru
      _
    %v16 = vld [vmem:[%s0] sm:$0xf]
    %v17 = vunpack.c.l.bf16 %v16
    %v18 = vld [vmem:[%s1] sm:$0xff]
    %v19 = vlaneseq
    %v20 = vand.u32 %v19, 127
    %vm21 = vcmask 130048
    %v22 = vsel %vm21, %v17, -inf
    %23 = vmax.xlane.f32.xlu0 %v22
    %v24 = vpop.xlane.xlu0 %23
    %v25 = vsub.f32 %v17, %v24
    %v26 = vmul.f32 %v25, 1.442695
    %v27 = vpow.pop %v26
    %v28 = vsel %vm21, %v27, 0.0
    %29 = vadd.xlane.f32.xlu0 %v28
    %v30 = vpop.xlane.xlu0 %29
    %31 = vset.pattern.permute.xlu0 0
    %32 = vperm.xlu0 %31, %v18
    %v33 = vpop.permute.xlu0 %32
    %vm34 = vcmp.eq.s32.totalorder %v20, %v33
    %v35 = vsel %vm34, 1, 0
    %v36 = vcvt.s32.f32 %v35
    %v37 = vmul.f32 %v36, %v17
    %v38 = vsel %vm21, %v37, 0.0
    %39 = vadd.xlane.f32.xlu0 %v38
    %v40 = vpop.xlane.xlu0 %39
    %v41 = vlog2.pop %v30
    %v42 = vmul.f32 %v41, 0.6931472
    %v43 = vadd.f32 %v24, %v42
    %v44 = vsub.f32 %v43, %v40
    %vm45 = vcmp.eq.f32.partialorder %v17, %v24
    %v46 = vsel %vm45, %v20, 16
    %v47 = vsel %vm21, %v46, 2147483647
    %v48 = vand.u32 %v47, 65535
    %v49 = vshra.s32 %v47, 16
    %v50 = vcvt.s32.f32 %v48
    %v51 = vcvt.s32.f32 %v49
    %52 = vmin.xlane.f32.xlu0 %v51
    %v53 = vpop.xlane.xlu0 %52
    %vm54 = vcmp.eq.f32.partialorder %v51, %v53
    %v55 = vsel %vm54, %v50, inf
    %56 = vmin.xlane.f32.xlu0 %v55
    %v57 = vpop.xlane.xlu0 %56
    %v58 = vcvt.f32.s32 %v57
    %v59 = vcvt.f32.s32 %v53
    %v60 = vshll.u32 %v59, 16
    %v61 = vadd.s32 %v60, %v58
    %vm62 = vcmp.eq.s32.totalorder %v61, %v18
    %v63 = vsel %vm62, 1, 0
    %v64 = vcvt.s32.f32 %v63
    %vm65 = vcmask 7168
    %66 = vst.msk [vmem:[%s2] sm:$0xff] %vm65, %v61
    %v67 = vsel %vm65, %v44, 0.0
    %68 = vadd.xlane.f32.xlu0 %v67
    %v69 = vpop.xlane.xlu0 %68
    %v70 = vrot.slane %v69, 4
    %v71 = vadd.f32 %v69, %v70
    %v72 = vrot.slane %v71, 2
    %v73 = vadd.f32 %v71, %v72
    %v74 = vrot.slane %v73, 1
    %v75 = vadd.f32 %v73, %v74
    %s76 = vtos %v75
    %v77 = vstv %s76
    %78 = vst [vmem:[#allocation2] sm:$0x1] %v77
    %v79 = vsel %vm65, %v64, 0.0
    %80 = vadd.xlane.f32.xlu0 %v79
    %v81 = vpop.xlane.xlu0 %80
    %v82 = vrot.slane %v81, 4
    %v83 = vadd.f32 %v81, %v82
    %v84 = vrot.slane %v83, 2
    %v85 = vadd.f32 %v83, %v84
    %v86 = vrot.slane %v85, 1
    %v87 = vadd.f32 %v85, %v86
    %s88 = vtos %v87
    %v89 = vstv %s88
    %90 = vst [vmem:[#allocation4] sm:$0x1] %v89
    // Predicated region
    $region10: #{tpu_custom_call.1} parent=1 // pred_check
      _
    $region11: #{tpu_custom_call.1} parent=1 // pred_check_branch
      %92 = sbr.rel (0) target = $region13
    $region12: #{tpu_custom_call.1} parent=1 // pred_region
      _
    $region13: #{tpu_custom_call.1} parent=1 // pred_fallthru
      _
    // Predicated region
    $region14: #{tpu_custom_call.1} parent=1 // pred_check
      _
    $region15: #{tpu_custom_call.1} parent=1 // pred_check_branch
      %94 = sbr.rel (0) target = $region17
    $region16: #{tpu_custom_call.1} parent=1 // pred_region
      %96 = vsyncadd [#allocation3], 0
      %s98 = sshll.u32 [#allocation2], 4
      %s99 = int_to_ptr.vmem [resolvable:$true] %s98
      %s100 = sshll.u32 %s3, 4
      %s101 = int_to_ptr.hbm [resolvable:$true] %s100
      %103 = dma.vmem_to_hbm [thread:$0]  %s99, 16, %s101, [#allocation3]
    $region17: #{tpu_custom_call.1} parent=1 // pred_fallthru
      _
    // Predicated region
    $region18: #{tpu_custom_call.1} parent=1 // pred_check
      _
    $region19: #{tpu_custom_call.1} parent=1 // pred_check_branch
      %105 = sbr.rel (0) target = $region21
    $region20: #{tpu_custom_call.1} parent=1 // pred_region
      %107 = vsyncadd [#allocation5], 0
      %s109 = sshll.u32 [#allocation4], 4
      %s110 = int_to_ptr.vmem [resolvable:$true] %s109
      %s111 = sshll.u32 %s4, 4
      %s112 = int_to_ptr.hbm [resolvable:$true] %s111
      %114 = dma.vmem_to_hbm [thread:$0]  %s110, 16, %s112, [#allocation5]
    $region21: #{tpu_custom_call.1} parent=1 // pred_fallthru
      _
    // Predicated region
    $region22: #{tpu_custom_call.1} parent=1 // pred_check
      _
    $region23: #{tpu_custom_call.1} parent=1 // pred_check_branch
      %116 = sbr.rel (0) target = $region25
    $region24: #{tpu_custom_call.1} parent=1 // pred_region
      _
    $region25: #{tpu_custom_call.1} parent=1 // pred_fallthru
      _
    // Predicated region
    $region26: #{tpu_custom_call.1} parent=1 // pred_check
      _
    $region27: #{tpu_custom_call.1} parent=1 // pred_check_branch
      %118 = sbr.rel (0) target = $region29
    $region28: #{tpu_custom_call.1} parent=1 // pred_region
      %120 = dma.done [#allocation3], 16
    $region29: #{tpu_custom_call.1} parent=1 // pred_fallthru
      _
    // Predicated region
    $region30: #{tpu_custom_call.1} parent=1 // pred_check
      _
    $region31: #{tpu_custom_call.1} parent=1 // pred_check_branch
      %122 = sbr.rel (0) target = $region33
    $region32: #{tpu_custom_call.1} parent=1 // pred_region
      %124 = dma.done [#allocation5], 16
    $region33: #{tpu_custom_call.1} parent=1 // pred_fallthru
      _
    %125 = vsyncpa [#allocation3], 1
    %126 = vsyncpa [#allocation5], 1

</llo_original>
